<compile_context>
chip_gen: v6e
topology: v6e:2x2x1
jax: 0.10.0
libtpu: 0.0.40
codegen_flags: <defaults>
</compile_context>

<pallas_src>
import functools

import jax
import jax.numpy as jnp
from jax import lax
from jax.experimental import pallas as pl
from jax.experimental.pallas import tpu as pltpu

_LANES = 128  # one f32 vreg row


def _fused_kernel(in_ref, o_ref, *, n_y, n_x):
    v = in_ref[...]                                        # (1, 128) f32, one vld
    lane = lax.broadcasted_iota(jnp.int32, v.shape, 1)
    y_mask = lane < n_y                                    # lanes holding y
    x_mask = jnp.logical_and(lane >= n_y, lane < n_y + n_x)  # lanes holding x

    x_sum = jnp.sum(jnp.where(x_mask, v, 0.0))             # sum(x)
    y_max = jnp.max(jnp.where(y_mask, v, -jnp.inf))        # max(y)
    b = x_sum * (1.0 / n_x) + y_max                        # mean(cat(x,x)) + max(y)

    # Full-width compute + unmasked store; lanes >= n_y are sliced off by the
    # wrapper, so their (garbage) values are harmless.
    o_ref[...] = b * jnp.maximum(v, 0.0)                   # b * relu(.)


@jax.jit
def fused_forward(x, y):
    """x: (B, C, L) float32, y: (P, Q, R) float32 -> (P, Q, R) float32."""
    n_x = x.size
    n_y = y.size
    pad = _LANES - n_y - n_x
    assert pad >= 0, "inputs no longer fit a single 128-lane slab"

    # Pack y | x | zero-pad into one lane-dense (1, 128) slab (fuses under jit).
    packed = jnp.concatenate(
        [
            y.reshape(-1).astype(jnp.float32),
            x.reshape(-1).astype(jnp.float32),
            jnp.zeros((pad,), jnp.float32),
        ]
    ).reshape(1, _LANES)

    out = pl.pallas_call(
        functools.partial(_fused_kernel, n_y=n_y, n_x=n_x),
        out_shape=jax.ShapeDtypeStruct((1, _LANES), jnp.float32),
        in_specs=[pl.BlockSpec(memory_space=pltpu.MemorySpace.VMEM)],
        out_specs=pl.BlockSpec(memory_space=pltpu.MemorySpace.VMEM),
    )(packed)

    return out[0, :n_y].reshape(y.shape)


def reference_forward(x, y):
    z = jnp.concatenate((x, x), axis=1)
    b = jnp.mean(z) + jnp.max(y)
    a = jnp.maximum(y, 0.0)
    return b * a


if __name__ == "__main__":
    key = jax.random.PRNGKey(0)
    kx, ky = jax.random.split(key)
    x = jax.random.normal(kx, (2, 3, 4), dtype=jnp.float32)
    y = jax.random.normal(ky, (3, 5, 6), dtype=jnp.float32)

    out = fused_forward(x, y)
    jax.block_until_ready(out)

    ref = reference_forward(x, y)
    assert out.shape == (3, 5, 6)
    assert jnp.allclose(out, ref, atol=1e-5, rtol=1e-5)

    print("KERNEL_OK")
</pallas_src>

<mosaic_0001>
module attributes {stable_mosaic.version = 11 : i64} {
  func.func @_fused_kernel(%arg0: memref<1x128xf32, #tpu.memory_space<vmem>>, %arg1: memref<1x128xf32, #tpu.memory_space<vmem>>) attributes {dimension_semantics = [], scalar_prefetch = 0 : i64, scratch_operands = 0 : i64, tpu.core_type = #tpu.core_type<tc>} {
    %c0 = arith.constant 0 : index
    %c0_0 = arith.constant 0 : index
    %0 = vector.load %arg0[%c0, %c0_0] : memref<1x128xf32, #tpu.memory_space<vmem>>, vector<1x128xf32>
    %1 = tpu.iota {dimensions = array<i32: 1>} : vector<1x128xi32>
    %c90_i32 = arith.constant 90 : i32
    %2 = vector.broadcast %c90_i32 : i32 to vector<1x128xi32>
    %3 = arith.cmpi slt, %1, %2 : vector<1x128xi32>
    %c90_i32_1 = arith.constant 90 : i32
    %4 = vector.broadcast %c90_i32_1 : i32 to vector<1x128xi32>
    %5 = arith.cmpi sge, %1, %4 : vector<1x128xi32>
    %c114_i32 = arith.constant 114 : i32
    %6 = vector.broadcast %c114_i32 : i32 to vector<1x128xi32>
    %7 = arith.cmpi slt, %1, %6 : vector<1x128xi32>
    %8 = arith.andi %5, %7 : vector<1x128xi1>
    %cst = arith.constant 0.000000e+00 : f32
    %9 = vector.broadcast %cst : f32 to vector<1x128xf32>
    %10 = arith.select %8, %0, %9 : vector<1x128xi1>, vector<1x128xf32>
    %11 = vector.shape_cast %10 : vector<1x128xf32> to vector<1x1x128xf32>
    %cst_2 = arith.constant dense<0.000000e+00> : vector<1xf32>
    %12 = vector.multi_reduction <add>, %11, %cst_2 [1, 2] : vector<1x1x128xf32> to vector<1xf32>
    %13 = vector.shape_cast %12 : vector<1xf32> to vector<1x1x1xf32>
    %14 = vector.extract %13[0, 0, 0] : f32 from vector<1x1x1xf32>
    %cst_3 = arith.constant 0xFF800000 : f32
    %15 = vector.broadcast %cst_3 : f32 to vector<1x128xf32>
    %16 = arith.select %3, %0, %15 : vector<1x128xi1>, vector<1x128xf32>
    %17 = vector.shape_cast %16 : vector<1x128xf32> to vector<1x1x128xf32>
    %cst_4 = arith.constant dense<0xFF800000> : vector<1xf32>
    %18 = vector.multi_reduction <maximumf>, %17, %cst_4 [1, 2] : vector<1x1x128xf32> to vector<1xf32>
    %19 = vector.shape_cast %18 : vector<1xf32> to vector<1x1x1xf32>
    %20 = vector.extract %19[0, 0, 0] : f32 from vector<1x1x1xf32>
    %cst_5 = arith.constant 0.0416666679 : f32
    %21 = arith.mulf %14, %cst_5 : f32
    %22 = arith.addf %21, %20 : f32
    %cst_6 = arith.constant 0.000000e+00 : f32
    %23 = vector.broadcast %cst_6 : f32 to vector<1x128xf32>
    %24 = arith.maximumf %0, %23 : vector<1x128xf32>
    %25 = vector.broadcast %22 : f32 to vector<1x128xf32>
    %26 = arith.mulf %25, %24 : vector<1x128xf32>
    %c0_7 = arith.constant 0 : index
    %c0_8 = arith.constant 0 : index
    %27 = vector.load %arg1[%c0_7, %c0_8] : memref<1x128xf32, #tpu.memory_space<vmem>>, vector<1x128xf32>
    tpu.vector_store %arg1[%c0_7, %c0_8], %26 {strides = array<i32>} : memref<1x128xf32, #tpu.memory_space<vmem>>, vector<1x128xf32>,
    return
  }
}

</mosaic_0001>

<llo_original>
// kernel: squeeze.1
$region0: #{squeeze.1}
  %s0 = inlined_call_operand.vmem [shape: f32[90], index: 0, kind: input, shape index: {}]
  %s1 = inlined_call_operand.vmem [shape: f32[3,5,6], index: 1, kind: output, shape index: {}]
  $region1: #{squeeze.1} parent=0
    #allocation0 [shape = 'u8[4096]{0}', space=vmem, size = 0x1000, scoped, tag = 'scoped mem for input reshape']
    %s3 = sshll.u32 1, 1
    %s4 = ssub.s32 %s3, 1
    %v5 = vld [vmem:[%s0] sm:%s4]
    %6 = vst [vmem:[#allocation0] sm:%s4] %v5
    %v7 = vld [vmem:[#allocation0] sm:$0x1]
    %vm8 = vcmask 48128
    %9 = vst.msk [vmem:[%s1] sm:$0x1] %vm8, %v7
    %v10 = vld [vmem:[#allocation0] sm:$0x1]
    %11 = vrot.lane.b32.xlu0 %v10, 122
    %v12 = vpop.permute.xlu0 %11
    %vm13 = vcmask 48128
    %s14 = scalar_lea.vmem %s1, 1
    %15 = vst.msk [vmem:[%s14] sm:$0x1] %vm13, %v12
    %v16 = vld [vmem:[#allocation0] sm:$0x1]
    %17 = vrot.lane.b32.xlu0 %v16, 116
    %v18 = vpop.permute.xlu0 %17
    %vm19 = vcmask 48128
    %s20 = scalar_lea.vmem %s1, 2
    %21 = vst.msk [vmem:[%s20] sm:$0x1] %vm19, %v18
    %v22 = vld [vmem:[#allocation0] sm:$0x1]
    %23 = vrot.lane.b32.xlu0 %v22, 110
    %v24 = vpop.permute.xlu0 %23
    %vm25 = vcmask 48128
    %s26 = scalar_lea.vmem %s1, 3
    %27 = vst.msk [vmem:[%s26] sm:$0x1] %vm25, %v24
    %v28 = vld [vmem:[#allocation0] sm:$0x1]
    %29 = vrot.lane.b32.xlu0 %v28, 104
    %v30 = vpop.permute.xlu0 %29
    %vm31 = vcmask 48128
    %s32 = scalar_lea.vmem %s1, 4
    %33 = vst.msk [vmem:[%s32] sm:$0x1] %vm31, %v30
    %v34 = vld [vmem:[#allocation0] sm:$0x1]
    %35 = vrot.lane.b32.xlu0 %v34, 98
    %v36 = vpop.permute.xlu0 %35
    %vm37 = vcmask 48128
    %s38 = scalar_lea.vmem %s1, 8
    %39 = vst.msk [vmem:[%s38] sm:$0x1] %vm37, %v36
    %v40 = vld [vmem:[#allocation0] sm:$0x1]
    %41 = vrot.lane.b32.xlu0 %v40, 92
    %v42 = vpop.permute.xlu0 %41
    %vm43 = vcmask 48128
    %s44 = scalar_lea.vmem %s1, 9
    %45 = vst.msk [vmem:[%s44] sm:$0x1] %vm43, %v42
    %v46 = vld [vmem:[#allocation0] sm:$0x1]
    %47 = vrot.lane.b32.xlu0 %v46, 86
    %v48 = vpop.permute.xlu0 %47
    %vm49 = vcmask 48128
    %s50 = scalar_lea.vmem %s1, 10
    %51 = vst.msk [vmem:[%s50] sm:$0x1] %vm49, %v48
    %v52 = vld [vmem:[#allocation0] sm:$0x1]
    %53 = vrot.lane.b32.xlu0 %v52, 80
    %v54 = vpop.permute.xlu0 %53
    %vm55 = vcmask 48128
    %s56 = scalar_lea.vmem %s1, 11
    %57 = vst.msk [vmem:[%s56] sm:$0x1] %vm55, %v54
    %v58 = vld [vmem:[#allocation0] sm:$0x1]
    %59 = vrot.lane.b32.xlu0 %v58, 74
    %v60 = vpop.permute.xlu0 %59
    %vm61 = vcmask 48128
    %s62 = scalar_lea.vmem %s1, 12
    %63 = vst.msk [vmem:[%s62] sm:$0x1] %vm61, %v60
    %v64 = vld [vmem:[#allocation0] sm:$0x1]
    %65 = vrot.lane.b32.xlu0 %v64, 68
    %v66 = vpop.permute.xlu0 %65
    %vm67 = vcmask 48128
    %s68 = scalar_lea.vmem %s1, 16
    %69 = vst.msk [vmem:[%s68] sm:$0x1] %vm67, %v66
    %v70 = vld [vmem:[#allocation0] sm:$0x1]
    %71 = vrot.lane.b32.xlu0 %v70, 62
    %v72 = vpop.permute.xlu0 %71
    %vm73 = vcmask 48128
    %s74 = scalar_lea.vmem %s1, 17
    %75 = vst.msk [vmem:[%s74] sm:$0x1] %vm73, %v72
    %v76 = vld [vmem:[#allocation0] sm:$0x1]
    %77 = vrot.lane.b32.xlu0 %v76, 56
    %v78 = vpop.permute.xlu0 %77
    %vm79 = vcmask 48128
    %s80 = scalar_lea.vmem %s1, 18
    %81 = vst.msk [vmem:[%s80] sm:$0x1] %vm79, %v78
    %v82 = vld [vmem:[#allocation0] sm:$0x1]
    %83 = vrot.lane.b32.xlu0 %v82, 50
    %v84 = vpop.permute.xlu0 %83
    %vm85 = vcmask 48128
    %s86 = scalar_lea.vmem %s1, 19
    %87 = vst.msk [vmem:[%s86] sm:$0x1] %vm85, %v84
    %v88 = vld [vmem:[#allocation0] sm:$0x1]
    %89 = vrot.lane.b32.xlu0 %v88, 44
    %v90 = vpop.permute.xlu0 %89
    %vm91 = vcmask 48128
    %s92 = scalar_lea.vmem %s1, 20
    %93 = vst.msk [vmem:[%s92] sm:$0x1] %vm91, %v90

// kernel: fused_forward.1
$region0: #{fused_forward.1}
  #allocation0 [shape = 'u32[]', space=smem, size = 0x4, offset = 0x4, fixed_abs, tag = 'smem constant byte address 0x4 - core index']
  #allocation1 [shape = 'u32[144,128]{1,0:T(1,128)}', space=vmem, size = 0x12000, scoped, tag = 'internal scratch']
  %s0 = inlined_call_operand.vmem [shape: f32[1,128], index: 0, kind: input, shape index: {}]
  %s1 = inlined_call_operand.vmem [shape: f32[1,128], index: 1, kind: output, shape index: {}]
  %s2 = sld [smem:[#allocation0]]
  $region14: #{fused_forward.1} parent=0
    _
  %s4 = ssub.s32 1, %s2
  %s5 = scalar_select 0, %s4, %s2
  // Predicated region
  $region2: #{fused_forward.1} parent=0 // pred_check
    _
  $region3: #{fused_forward.1} parent=0 // pred_check_branch
    %7 = sbr.rel (0) target = $region5
  $region4: #{fused_forward.1} parent=0 // pred_region
    _
  $region5: #{fused_forward.1} parent=0 // pred_fallthru
    _
  %v8 = vld [vmem:[%s0] sm:$0x1]
  %v9 = vlaneseq
  %v10 = vand.u32 %v9, 127
  %vm11 = vcmp.lt.s32.totalorder %v10, 90
  %vm12 = vcmp.ge.s32.totalorder %v10, 90
  %vm13 = vcmp.lt.s32.totalorder %v10, 114
  %vm14 = vmand %vm12, %vm13
  %v15 = vsel %vm14, %v8, 0.0
  %vm16 = vcmask 1040384
  %v17 = vsel %vm16, %v15, 0.0
  %18 = vadd.xlane.f32.xlu0 %v17
  %v19 = vpop.xlane.xlu0 %18
  %v20 = vrot.slane %v19, 4
  %v21 = vadd.f32 %v19, %v20
  %v22 = vrot.slane %v21, 2
  %v23 = vadd.f32 %v21, %v22
  %v24 = vrot.slane %v23, 1
  %v25 = vadd.f32 %v23, %v24
  %s26 = vtos %v25
  %v27 = vsel %vm11, %v8, -inf
  %v28 = vsel %vm16, %v27, -inf
  %29 = vmax.xlane.f32.xlu0 %v28
  %v30 = vpop.xlane.xlu0 %29
  %v31 = vrot.slane %v30, 4
  %v32 = vmax.f32 %v30, %v31
  %v33 = vrot.slane %v32, 2
  %v34 = vmax.f32 %v32, %v33
  %v35 = vrot.slane %v34, 1
  %v36 = vmax.f32 %v34, %v35
  %s37 = vtos %v36
  %s38 = smul.f32 %s26, 0.041666668
  %s39 = sadd.f32 %s38, %s37
  %v40 = vmax.f32 %v8, 0.0
  %v41 = vstv %s39
  %v42 = vmul.f32 %v41, %v40
  %43 = vst [vmem:[%s1] sm:$0x1] %v42
  // Predicated region
  $region6: #{fused_forward.1} parent=0 // pred_check
    _
  $region7: #{fused_forward.1} parent=0 // pred_check_branch
    %45 = sbr.rel (0) target = $region9
  $region8: #{fused_forward.1} parent=0 // pred_region
    _
  $region9: #{fused_forward.1} parent=0 // pred_fallthru
    _
  // Predicated region
  $region10: #{fused_forward.1} parent=0 // pred_check
    _
  $region11: #{fused_forward.1} parent=0 // pred_check_branch
    %47 = sbr.rel (0) target = $region13
  $region12: #{fused_forward.1} parent=0 // pred_region
    _
  $region13: #{fused_forward.1} parent=0 // pred_fallthru
    _

</llo_original>
